<compile_context>
chip_gen: v6e
topology: v6e:2x2x1
jax: 0.10.0
libtpu: 0.0.40
codegen_flags: <defaults>
</compile_context>

<pallas_src>
import jax
import jax.numpy as jnp
from jax.experimental import pallas as pl
from jax.experimental.pallas import tpu as pltpu


def _maxmin_pair_kernel(a_ref, b_ref, o_ref):
    # a_ref, b_ref: (1, B_C2, T_HW)   even / odd channels of one (n, C2-tile, HW-tile)
    # o_ref:        (1, 2, B_C2, T_HW)  [:, 0] = pairwise max, [:, 1] = pairwise min
    a = a_ref[...]
    b = b_ref[...]
    o_ref[:, 0, :, :] = jnp.maximum(a, b)
    o_ref[:, 1, :, :] = jnp.minimum(a, b)


def _round_up(x, m):
    return (x + m - 1) // m * m


def _chip_budget():
    """(per-input-block target bytes, vmem_limit_bytes) by TPU generation.

    Pipeline footprint is ~8x the input block (2 inputs + 1 double-width output,
    all double-buffered), so keep 8*target <= vmem_limit <= physical VMEM.
    """
    try:
        vmem_phys = pltpu.get_tpu_info().vmem_capacity_bytes
    except Exception:
        vmem_phys = 64 * 1024 * 1024  # conservative: smallest of v5e/v6e/v7x
    if vmem_phys >= 96 * 1024 * 1024:
        # v5e / v6e: 128 MiB physical VMEM — big blocks amortize per-step cost
        # (also overrides v5e's 16 MiB scoped-VMEM default).
        return 8 * 1024 * 1024, 96 * 1024 * 1024
    # v7x: 64 MiB physical VMEM per TensorCore.
    return 4 * 1024 * 1024, 48 * 1024 * 1024


def _choose_blocks(C2, HWp, itemsize, target_bytes):
    """Pick (B_C2, T_HW) input-block dims plus the candidate lists.

    VMEM accounting includes sublane padding: a (B_C2, T_HW) block really
    occupies round_up(B_C2, sub) * T_HW * itemsize bytes with
    sub = 8 (f32) / 16 (bf16) / 32 (int8).  Prefers the largest T_HW (large
    contiguous DMA bursts, stride 2*HWp between rows) and then the largest
    sublane-aligned C2 tile that fits the budget.
    """
    sub = max(8, 32 // itemsize)

    def padded_bytes(b_c2, t_hw):
        return _round_up(b_c2, sub) * t_hw * itemsize

    # Candidate C2 blocks: the full dim (always legal) plus sublane-aligned divisors.
    c2_cands = sorted(
        {C2} | {d for d in range(sub, C2, sub) if C2 % d == 0}, reverse=True)
    # Candidate HW tiles: multiple-of-128 divisors of HWp, descending.
    n128 = HWp // 128
    hw_cands = [d * 128 for d in range(n128, 0, -1) if n128 % d == 0]

    b_c2, t_hw = c2_cands[-1], hw_cands[-1]   # smallest legal block (last resort)
    for th in hw_cands:
        fit = next((bc for bc in c2_cands if padded_bytes(bc, th) <= target_bytes), None)
        if fit is not None:
            b_c2, t_hw = fit, th
            break
    return b_c2, t_hw, c2_cands, hw_cands


def maxmin(x: jax.Array) -> jax.Array:
    """MaxMin activation. x: (N, C, H, W) with C even. Returns (N, C, H, W):
    first C//2 channels = pairwise max, last C//2 channels = pairwise min."""
    N, C, H, W = x.shape
    assert C % 2 == 0 and C >= 2, "channel dim must be even"
    C2 = C // 2
    HW = H * W
    itemsize = jnp.dtype(x.dtype).itemsize

    # Flatten spatial dims; pad once to a lane-aligned length if needed so every
    # input uses the single-read lane-window fast path (no strided host slices).
    x_flat = x.reshape(N, C, HW)
    if HW % 128 != 0:
        HWp = _round_up(HW, 512)   # multiple of 512 => good tile-size divisors
        x_flat = jnp.pad(x_flat, ((0, 0), (0, 0), (0, HWp - HW)))
    else:
        HWp = HW
    # Free view: row (n, c2) = [even channel 2*c2 in lanes [0, HWp) |
    #                           odd  channel 2*c2+1 in lanes [HWp, 2*HWp)]
    x2 = x_flat.reshape(N, C2, 2 * HWp)

    target_block, vmem_limit = _chip_budget()
    B_C2, T_HW, c2_cands, hw_cands = _choose_blocks(C2, HWp, itemsize, target_block)
    num_c2 = C2 // B_C2
    num_hw = HWp // T_HW
    if N * num_c2 * num_hw == 1:
        # v7x has 2 TensorCores/chip: make sure the parallel grid has >= 2 steps
        # so both cores get work.  Harmless on single-TC v5e/v6e.
        smaller_hw = [t for t in hw_cands if t < T_HW]
        smaller_c2 = [c for c in c2_cands if c < B_C2]
        if smaller_hw:
            T_HW = smaller_hw[0]
            num_hw = HWp // T_HW
        elif smaller_c2:
            B_C2 = smaller_c2[0]
            num_c2 = C2 // B_C2

    out_shape = jax.ShapeDtypeStruct((N, 2, C2, HWp), x.dtype)
    cost = pl.CostEstimate(
        flops=N * C * HW,                          # one max + one min per pair / pixel
        transcendentals=0,
        bytes_accessed=2 * N * C * HW * itemsize,  # read x once, write out once
    )

    out4 = pl.pallas_call(
        _maxmin_pair_kernel,
        out_shape=out_shape,
        grid_spec=pltpu.PrefetchScalarGridSpec(
            num_scalar_prefetch=0,
            grid=(N, num_c2, num_hw),
            in_specs=[
                # even channels: lane window [0, HWp)
                pl.BlockSpec((1, B_C2, T_HW), lambda n, c, h: (n, c, h)),
                # odd channels: lane window [HWp, 2*HWp)
                pl.BlockSpec((1, B_C2, T_HW), lambda n, c, h: (n, c, num_hw + h)),
            ],
            out_specs=pl.BlockSpec((1, 2, B_C2, T_HW), lambda n, c, h: (n, 0, c, h)),
        ),
        compiler_params=pltpu.CompilerParams(
            dimension_semantics=("parallel", "parallel", "parallel"),
            vmem_limit_bytes=vmem_limit,
        ),
        cost_estimate=cost,
    )(x2, x2)

    # (N, 2, C2, HWp) -> crop spatial pad -> (N, C, H, W).
    # First C2 output channels = max half, next C2 = min half (matches torch.cat).
    return out4[:, :, :, :HW].reshape(N, C, H, W)


def _maxmin_ref(x: jax.Array) -> jax.Array:
    N, C, H, W = x.shape
    y = x.reshape(N, C // 2, 2, H, W)
    return jnp.concatenate([y.max(axis=2), y.min(axis=2)], axis=1)


if __name__ == "__main__":
    key = jax.random.PRNGKey(0)

    # Main path: HW = 256 is a multiple of 128 (no padding needed).
    x1 = jax.random.normal(key, (2, 4, 16, 16), dtype=jnp.float32)
    out1 = jax.block_until_ready(maxmin(x1))
    ref1 = _maxmin_ref(x1)
    assert out1.shape == (2, 4, 16, 16)
    assert jnp.allclose(out1, ref1), "mismatch vs reference (aligned path)"

    # Padded path: HW = 25 is not a multiple of 128.
    x2 = jax.random.normal(jax.random.PRNGKey(0), (2, 4, 5, 5), dtype=jnp.float32)
    out2 = jax.block_until_ready(maxmin(x2))
    ref2 = _maxmin_ref(x2)
    assert out2.shape == (2, 4, 5, 5)
    assert jnp.allclose(out2, ref2), "mismatch vs reference (padded path)"

    # Forced grid-split path (N=1, single natural block) + bf16 sublane accounting.
    x3 = jax.random.normal(jax.random.PRNGKey(0), (1, 8, 16, 16), dtype=jnp.bfloat16)
    out3 = jax.block_until_ready(maxmin(x3))
    ref3 = _maxmin_ref(x3)
    assert out3.shape == (1, 8, 16, 16)
    assert jnp.allclose(out3.astype(jnp.float32), ref3.astype(jnp.float32)), \
        "mismatch vs reference (split / bf16 path)"

    print("KERNEL_OK")
</pallas_src>

<mosaic_0001>
module attributes {stable_mosaic.version = 11 : i64} {
  func.func @_maxmin_pair_kernel(%arg0: i32, %arg1: i32, %arg2: i32, %arg3: memref<1x2x256xf32, #tpu.memory_space<vmem>>, %arg4: memref<1x2x256xf32, #tpu.memory_space<vmem>>, %arg5: memref<1x2x2x256xf32, #tpu.memory_space<vmem>>) attributes {dimension_semantics = [#tpu.dimension_semantics<parallel>, #tpu.dimension_semantics<parallel>, #tpu.dimension_semantics<parallel>], iteration_bounds = array<i64: 2, 1, 1>, scalar_prefetch = 0 : i64, scratch_operands = 0 : i64, tpu.core_type = #tpu.core_type<tc>, window_params = [{transform_indices = @transform_0, window_bounds = array<i64: 1, 2, 256>}, {transform_indices = @transform_1, window_bounds = array<i64: 1, 2, 256>}, {transform_indices = @transform_2, window_bounds = array<i64: 1, 2, 2, 256>}]} {
    %c0 = arith.constant 0 : index
    %c0_0 = arith.constant 0 : index
    %c0_1 = arith.constant 0 : index
    %0 = vector.load %arg3[%c0, %c0_0, %c0_1] : memref<1x2x256xf32, #tpu.memory_space<vmem>>, vector<1x2x256xf32>
    %c0_2 = arith.constant 0 : index
    %c0_3 = arith.constant 0 : index
    %c0_4 = arith.constant 0 : index
    %1 = vector.load %arg4[%c0_2, %c0_3, %c0_4] : memref<1x2x256xf32, #tpu.memory_space<vmem>>, vector<1x2x256xf32>
    %2 = arith.maximumf %0, %1 : vector<1x2x256xf32>
    %c0_5 = arith.constant 0 : index
    %c0_6 = arith.constant 0 : index
    %c0_7 = arith.constant 0 : index
    %c0_8 = arith.constant 0 : index
    %3 = vector.load %arg5[%c0_5, %c0_6, %c0_7, %c0_8] : memref<1x2x2x256xf32, #tpu.memory_space<vmem>>, vector<1x1x2x256xf32>
    %4 = vector.shape_cast %3 : vector<1x1x2x256xf32> to vector<1x2x256xf32>
    %5 = vector.shape_cast %2 : vector<1x2x256xf32> to vector<1x1x2x256xf32>
    tpu.vector_store %arg5[%c0_5, %c0_6, %c0_7, %c0_8], %5 {strides = array<i32>} : memref<1x2x2x256xf32, #tpu.memory_space<vmem>>, vector<1x1x2x256xf32>,
    %6 = arith.minimumf %0, %1 : vector<1x2x256xf32>
    %c0_9 = arith.constant 0 : index
    %c1 = arith.constant 1 : index
    %c0_10 = arith.constant 0 : index
    %c0_11 = arith.constant 0 : index
    %7 = vector.load %arg5[%c0_9, %c1, %c0_10, %c0_11] : memref<1x2x2x256xf32, #tpu.memory_space<vmem>>, vector<1x1x2x256xf32>
    %8 = vector.shape_cast %7 : vector<1x1x2x256xf32> to vector<1x2x256xf32>
    %9 = vector.shape_cast %6 : vector<1x2x256xf32> to vector<1x1x2x256xf32>
    tpu.vector_store %arg5[%c0_9, %c1, %c0_10, %c0_11], %9 {strides = array<i32>} : memref<1x2x2x256xf32, #tpu.memory_space<vmem>>, vector<1x1x2x256xf32>,
    return
  }
  func.func @transform_0(%arg0: i32, %arg1: i32, %arg2: i32) -> (i32, i32, i32) {
    %c0_i32 = arith.constant 0 : i32
    return %arg0, %arg1, %arg2 : i32, i32, i32
  }
  func.func @transform_1(%arg0: i32, %arg1: i32, %arg2: i32) -> (i32, i32, i32) {
    %c1_i32 = arith.constant 1 : i32
    %0 = arith.addi %c1_i32, %arg2 : i32
    %c0_i32 = arith.constant 0 : i32
    return %arg0, %arg1, %0 : i32, i32, i32
  }
  func.func @transform_2(%arg0: i32, %arg1: i32, %arg2: i32) -> (i32, i32, i32, i32) {
    %c0_i32 = arith.constant 0 : i32
    %c0_i32_0 = arith.constant 0 : i32
    return %arg0, %c0_i32, %arg1, %arg2 : i32, i32, i32, i32
  }
}

</mosaic_0001>

<llo_original>
// kernel: tpu_custom_call.1
$region0: #{tpu_custom_call.1}
  #allocation0 [shape = 'u32[]', space=smem, size = 0x4, offset = 0x4, fixed_abs, tag = 'smem constant byte address 0x4 - core index']
  #allocation1 [shape = 'u32[144,128]{1,0:T(1,128)}', space=vmem, size = 0x12000, scoped, tag = 'internal scratch']
  %s0 = inlined_call_operand.hbm [shape: f32[2,2,512], index: 0, kind: input, shape index: {}]
  %s1 = inlined_call_operand.hbm [shape: f32[2,2,512], index: 1, kind: input, shape index: {}]
  %s2 = inlined_call_operand.hbm [shape: f32[2,2,2,256], index: 2, kind: output, shape index: {}]
  %s3 = sld [smem:[#allocation0]]
  $region49: #{tpu_custom_call.1} parent=0
    _
  %s5 = ssub.s32 1, %s3
  %s6 = scalar_select 0, %s5, %s3
  $region1: #{tpu_custom_call.1} parent=0
    #allocation2 [shape = 'u8[4096]{0}', space=vmem, size = 0x1000, scoped, tag = 'input window, operand 0']
    #allocation3 [shape = 's32[2]{0}', space=sflag, size = 0x8, scoped, tag = 'scoped memory for tpu_custom_call.1']
    #allocation4 [shape = 's32[2]{0}', space=sflag, size = 0x8, scoped, tag = 'scoped memory for tpu_custom_call.1']
    #allocation5 [shape = 'u8[4096]{0}', space=vmem, size = 0x1000, scoped, tag = 'input window, operand 1']
    #allocation6 [shape = 's32[2]{0}', space=sflag, size = 0x8, scoped, tag = 'scoped memory for tpu_custom_call.1']
    #allocation7 [shape = 'u8[8192]{0}', space=vmem, size = 0x2000, scoped, tag = 'output window, operand 0']
    %7 = vsyncpa [#allocation3], 0
    %s8 = scalar_lea.sflag [#allocation3], 1
    %9 = vsyncpa %s8, 0
    %10 = vsyncpa [#allocation6], 0
    %s11 = scalar_lea.sflag [#allocation6], 1
    %12 = vsyncpa %s11, 0
    %13 = vsyncpa [#allocation4], 0
    %s14 = scalar_lea.sflag [#allocation4], 1
    %15 = vsyncpa %s14, 0
    loop: start=0, step=1, limit=4
    $region2: #{tpu_custom_call.1} parent=1 // loop_pre_header
      _
    $region3: #{tpu_custom_call.1} parent=1 // loop_header
      %s17 = sphi 0, %s21
      %p18 = scmp.ge.s32.totalorder %s17, 4
      %s24 = sphi 0, %s43
      %s25 = sphi 0, %s39
      %s26 = sphi 0, %s35
      %s27 = sphi 0, %s24
      %s28 = sphi 0, %s25
      %s29 = sphi 0, %s26
      %s30 = sphi 0, %s27
      %s31 = sphi 0, %s28
      %s32 = sphi 0, %s29
      %s50 = sphi 0, %s52
      %s53 = sphi 0, %s50
      %s54 = sphi 0, %s53
      %s70 = sphi 0, %s54
      %s82 = sphi 0, %s84
      %s85 = sphi 0, %s82
      %s86 = sphi 0, %s85
      %s102 = sphi 0, %s86
      %s112 = sphi 0, %s114
      %s115 = sphi 0, %s112
      %s116 = sphi 0, %s115
      %s132 = sphi 0, %s116
    $region4: #{tpu_custom_call.1} parent=1 // loop_header_branch
      %20 = sbr.rel (%p18) target = $region8
    $region5: #{tpu_custom_call.1} parent=1 // loop_body
      %s22 = ssub.s32 %s17, 1
      %s23 = ssub.s32 %s17, 2
      %s33 = sadd.s32 1, %s26
      %p34 = scmp.ge.s32.totalorder %s33, 1
      %s35 = scalar_select %p34, 0, %s33
      %s36 = sadd.s32 1, %s25
      %s37 = scalar_select %p34, %s36, %s25
      %p38 = scmp.ge.s32.totalorder %s37, 1
      %s39 = scalar_select %p38, 0, %s37
      %s40 = sadd.s32 1, %s24
      %s41 = scalar_select %p38, %s40, %s24
      %p42 = scmp.ge.s32.totalorder %s41, 2
      %s43 = scalar_select %p42, 0, %s41
      %s44 = ssub.s32 %s24, %s43
      %s45 = ssub.s32 %s25, %s39
      %s46 = sor.u32 %s44, %s45
      %s47 = ssub.s32 %s26, %s35
      %s48 = sor.u32 %s46, %s47
      %p49 = scmp.eq.s32.totalorder %s48, 0
      %s51 = sadd.s32 %s50, 1
      %s52 = scalar_select %p49, %s50, %s51
      %p55 = pneg %p49
      %p56 = scmp.eq.s32.totalorder %s17, 1
      %p57 = por %p55, %p56
      %p58 = scmp.ne.s32.totalorder %s50, %s53
      %p59 = scmp.eq.s32.totalorder %s17, 0
      %p60 = por %p58, %p59
      %p61 = scmp.ne.s32.totalorder %s50, %s53
      %p62 = scmp.eq.s32.totalorder %s22, 1
      %p63 = por %p61, %p62
      %p64 = scmp.ne.s32.totalorder %s53, %s54
      %p65 = scmp.eq.s32.totalorder %s22, 0
      %p66 = por %p64, %p65
      %p67 = scmp.ne.s32.totalorder %s53, %s54
      %p68 = scmp.eq.s32.totalorder %s23, 1
      %p69 = por %p67, %p68
      %p71 = scmp.ne.s32.totalorder %s54, %s70
      %p72 = scmp.eq.s32.totalorder %s23, 0
      %p73 = por %p71, %p72
      %s74 = sadd.s32 %s26, 1
      %s75 = sadd.s32 %s35, 1
      %s76 = ssub.s32 %s24, %s43
      %s77 = ssub.s32 %s25, %s39
      %s78 = sor.u32 %s76, %s77
      %s79 = ssub.s32 %s74, %s75
      %s80 = sor.u32 %s78, %s79
      %p81 = scmp.eq.s32.totalorder %s80, 0
      %s83 = sadd.s32 %s82, 1
      %s84 = scalar_select %p81, %s82, %s83
      %p87 = pneg %p81
      %p88 = scmp.eq.s32.totalorder %s17, 1
      %p89 = por %p87, %p88
      %p90 = scmp.ne.s32.totalorder %s82, %s85
      %p91 = scmp.eq.s32.totalorder %s17, 0
      %p92 = por %p90, %p91
      %p93 = scmp.ne.s32.totalorder %s82, %s85
      %p94 = scmp.eq.s32.totalorder %s22, 1
      %p95 = por %p93, %p94
      %p96 = scmp.ne.s32.totalorder %s85, %s86
      %p97 = scmp.eq.s32.totalorder %s22, 0
      %p98 = por %p96, %p97
      %p99 = scmp.ne.s32.totalorder %s85, %s86
      %p100 = scmp.eq.s32.totalorder %s23, 1
      %p101 = por %p99, %p100
      %p103 = scmp.ne.s32.totalorder %s86, %s102
      %p104 = scmp.eq.s32.totalorder %s23, 0
      %p105 = por %p103, %p104
      %s106 = ssub.s32 %s24, %s43
      %s107 = ssub.s32 %s25, %s39
      %s108 = sor.u32 %s106, %s107
      %s109 = ssub.s32 %s26, %s35
      %s110 = sor.u32 %s108, %s109
      %p111 = scmp.eq.s32.totalorder %s110, 0
      %s113 = sadd.s32 %s112, 1
      %s114 = scalar_select %p111, %s112, %s113
      %p117 = pneg %p111
      %p118 = scmp.eq.s32.totalorder %s17, 1
      %p119 = por %p117, %p118
      %p120 = scmp.ne.s32.totalorder %s112, %s115
      %p121 = scmp.eq.s32.totalorder %s17, 0
      %p122 = por %p120, %p121
      %p123 = scmp.ne.s32.totalorder %s112, %s115
      %p124 = scmp.eq.s32.totalorder %s22, 1
      %p125 = por %p123, %p124
      %p126 = scmp.ne.s32.totalorder %s115, %s116
      %p127 = scmp.eq.s32.totalorder %s22, 0
      %p128 = por %p126, %p127
      %p129 = scmp.ne.s32.totalorder %s115, %s116
      %p130 = scmp.eq.s32.totalorder %s23, 1
      %p131 = por %p129, %p130
      %p133 = scmp.ne.s32.totalorder %s116, %s132
      %p134 = scmp.eq.s32.totalorder %s23, 0
      %p135 = por %p133, %p134
      %p136 = scmp.le.s32.totalorder 1, %s17
      %p137 = scmp.lt.s32.totalorder %s17, 3
      %p138 = pnand %p136, %p137
      %p139 = pneg %p138
      // Predicated region
      $region9: #{tpu_custom_call.1} parent=5 // pred_check
        _
      $region10: #{tpu_custom_call.1} parent=5 // pred_check_branch
        %141 = sbr.rel (%p138) target = $region12
      $region11: #{tpu_custom_call.1} parent=5 // pred_region
        %s142 = ssub.s32 %s17, 1
      $region12: #{tpu_custom_call.1} parent=5 // pred_fallthru
        _
      %p143 = scmp.lt.s32.totalorder %s17, 2
      // Predicated region
      $region13: #{tpu_custom_call.1} parent=5 // pred_check
        %p144 = pneg %p143
      $region14: #{tpu_custom_call.1} parent=5 // pred_check_branch
        %146 = sbr.rel (%p144) target = $region16
      $region15: #{tpu_custom_call.1} parent=5 // pred_region
        // Predicated region
        $region17: #{tpu_custom_call.1} parent=15 // pred_check
          %p147 = pneg %p60
        $region18: #{tpu_custom_call.1} parent=15 // pred_check_branch
          %149 = sbr.rel (%p147) target = $region20
        $region19: #{tpu_custom_call.1} parent=15 // pred_region
          %s150 = sand.u32 %s50, 1
          %s151 = scalar_lea.sflag [#allocation3], %s150
          %s152 = sand.u32 %s50, 1
          %s153 = smul.addr %s152, 4
          %s154 = scalar_lea.vmem [#allocation2], %s153
          %s155 = smul.u32 2, %s26
          %s157 = ssub.s32 64, 64
          %158 = vsyncadd %s151, %s157
          %s159 = smul.addr %s25, 4
          %s160 = sadd.s32 %s155, %s159
          %s161 = smul.addr %s24, 4
          %s162 = sadd.s32 %s160, %s161
          %s163 = smul.addr %s162, 32
          %s164 = scalar_lea.hbm %s0, %s163
          %s166 = sshll.u32 %s154, 4
          %s167 = int_to_ptr.vmem [resolvable:$true] %s166
          %169 = dma.hbm_to_vmem [thread:$0]  %s164, 64, %s167, %s151
        $region20: #{tpu_custom_call.1} parent=15 // pred_fallthru
          _
        // Predicated region
        $region21: #{tpu_custom_call.1} parent=15 // pred_check
          %p170 = pneg %p92
        $region22: #{tpu_custom_call.1} parent=15 // pred_check_branch
          %172 = sbr.rel (%p170) target = $region24
        $region23: #{tpu_custom_call.1} parent=15 // pred_region
          %s173 = sand.u32 %s82, 1
          %s174 = scalar_lea.sflag [#allocation6], %s173
          %s175 = sand.u32 %s82, 1
          %s176 = smul.addr %s175, 4
          %s177 = scalar_lea.vmem [#allocation5], %s176
          %s178 = sadd.s32 %s26, 1
          %s179 = smul.u32 2, %s178
          %s181 = ssub.s32 64, 64
          %182 = vsyncadd %s174, %s181
          %s183 = smul.addr %s25, 4
          %s184 = sadd.s32 %s179, %s183
          %s185 = smul.addr %s24, 4
          %s186 = sadd.s32 %s184, %s185
          %s187 = smul.addr %s186, 32
          %s188 = scalar_lea.hbm %s1, %s187
          %s190 = sshll.u32 %s177, 4
          %s191 = int_to_ptr.vmem [resolvable:$true] %s190
          %193 = dma.hbm_to_vmem [thread:$0]  %s188, 64, %s191, %s174
        $region24: #{tpu_custom_call.1} parent=15 // pred_fallthru
          _
      $region16: #{tpu_custom_call.1} parent=5 // pred_fallthru
        _
      %p194 = scmp.le.s32.totalorder 1, %s17
      %p195 = scmp.lt.s32.totalorder %s17, 3
      %p196 = pnand %p194, %p195
      %p197 = pneg %p196
      // Predicated region
      $region25: #{tpu_custom_call.1} parent=5 // pred_check
        _
      $region26: #{tpu_custom_call.1} parent=5 // pred_check_branch
        %199 = sbr.rel (%p196) target = $region28
      $region27: #{tpu_custom_call.1} parent=5 // pred_region
        %s200 = ssub.s32 %s17, 1
        %s201 = sand.u32 %s53, 1
        %s202 = scalar_lea.sflag [#allocation3], %s201
        %s203 = sand.u32 %s53, 1
        %s204 = smul.addr %s203, 4
        %s205 = scalar_lea.vmem [#allocation2], %s204
        // Predicated region
        $region29: #{tpu_custom_call.1} parent=27 // pred_check
          %p206 = pneg %p66
        $region30: #{tpu_custom_call.1} parent=27 // pred_check_branch
          %208 = sbr.rel (%p206) target = $region32
        $region31: #{tpu_custom_call.1} parent=27 // pred_region
          %209 = dma.done %s202, 64
        $region32: #{tpu_custom_call.1} parent=27 // pred_fallthru
          _
        %s210 = sand.u32 %s85, 1
        %s211 = scalar_lea.sflag [#allocation6], %s210
        %s212 = sand.u32 %s85, 1
        %s213 = smul.addr %s212, 4
        %s214 = scalar_lea.vmem [#allocation5], %s213
        // Predicated region
        $region33: #{tpu_custom_call.1} parent=27 // pred_check
          %p215 = pneg %p98
        $region34: #{tpu_custom_call.1} parent=27 // pred_check_branch
          %217 = sbr.rel (%p215) target = $region36
        $region35: #{tpu_custom_call.1} parent=27 // pred_region
          %218 = dma.done %s211, 64
        $region36: #{tpu_custom_call.1} parent=27 // pred_fallthru
          _
        %s219 = sand.u32 %s53, 1
        %s220 = scalar_lea.sflag [#allocation3], %s219
        %s221 = sand.u32 %s53, 1
        %s222 = smul.addr %s221, 4
        %s223 = scalar_lea.vmem [#allocation2], %s222
        %p224 = pneg %p66
        %p225 = pneg %p63
        %s226 = sand.u32 %s85, 1
        %s227 = scalar_lea.sflag [#allocation6], %s226
        %s228 = sand.u32 %s85, 1
        %s229 = smul.addr %s228, 4
        %s230 = scalar_lea.vmem [#allocation5], %s229
        %p231 = pneg %p98
        %p232 = pneg %p95
        %p233 = pneg %p128
        %p234 = pneg %p125
        %s235 = sand.u32 %s115, 1
        %s236 = scalar_lea.sflag [#allocation4], %s235
        %s237 = sand.u32 %s115, 1
        %s238 = smul.addr %s237, 8
        %s239 = scalar_lea.vmem [#allocation7], %s238
        %s240 = smul.u32 2, %s29
        %s241 = sadd.s32 %s29, 1
        %s242 = smul.u32 2, %s241
        %s243 = smul.u32 2, %s29
        %v244 = vld [vmem:[%s205] sm:$0xf]
        %v245 = vld [vmem:[%s214] sm:$0xf]
        %v246 = vmax.f32 %v244, %v245
        %247 = vst [vmem:[%s239] sm:$0xf] %v246
        %v248 = vmin.f32 %v244, %v245
        %s249 = scalar_lea.vmem %s239, 4 [#allocation7]
        %250 = vst [vmem:[%s249] sm:$0xf] %v248
        %s251 = sand.u32 %s115, 1
        %s252 = scalar_lea.sflag [#allocation4], %s251
        %s253 = sand.u32 %s115, 1
        %s254 = smul.addr %s253, 8
        %s255 = scalar_lea.vmem [#allocation7], %s254
        // Predicated region
        $region37: #{tpu_custom_call.1} parent=27 // pred_check
          %p256 = pneg %p125
        $region38: #{tpu_custom_call.1} parent=27 // pred_check_branch
          %258 = sbr.rel (%p256) target = $region40
        $region39: #{tpu_custom_call.1} parent=27 // pred_region
          %s259 = smul.u32 2, %s29
          %s261 = ssub.s32 128, 128
          %262 = vsyncadd %s252, %s261
          %s263 = smul.addr %s28, 2
          %s264 = sadd.s32 %s259, %s263
          %s265 = smul.addr %s27, 4
          %s266 = sadd.s32 %s264, %s265
          %s267 = smul.addr %s266, 32
          %s268 = scalar_lea.hbm %s2, %s267
          %s269 = sshll.u32 %s255, 4
          %s270 = int_to_ptr.vmem [resolvable:$true] %s269
          %275 = dma.vmem_to_hbm [thread:$0]  %s270, 128, %s268, %s252, 64, 64, 4
        $region40: #{tpu_custom_call.1} parent=27 // pred_fallthru
          _
      $region28: #{tpu_custom_call.1} parent=5 // pred_fallthru
        _
      %p276 = scmp.le.s32.totalorder 2, %s17
      // Predicated region
      $region41: #{tpu_custom_call.1} parent=5 // pred_check
        %p277 = pneg %p276
      $region42: #{tpu_custom_call.1} parent=5 // pred_check_branch
        %279 = sbr.rel (%p277) target = $region44
      $region43: #{tpu_custom_call.1} parent=5 // pred_region
        %s280 = ssub.s32 %s17, 2
        // Predicated region
        $region45: #{tpu_custom_call.1} parent=43 // pred_check
          %p281 = pneg %p131
        $region46: #{tpu_custom_call.1} parent=43 // pred_check_branch
          %283 = sbr.rel (%p281) target = $region48
        $region47: #{tpu_custom_call.1} parent=43 // pred_region
          %s284 = sand.u32 %s116, 1
          %s285 = scalar_lea.sflag [#allocation4], %s284
          %s286 = sand.u32 %s116, 1
          %s287 = smul.addr %s286, 8
          %s288 = scalar_lea.vmem [#allocation7], %s287
          %289 = dma.done %s285, 128
        $region48: #{tpu_custom_call.1} parent=43 // pred_fallthru
          _
      $region44: #{tpu_custom_call.1} parent=5 // pred_fallthru
        _
    $region6: #{tpu_custom_call.1} parent=1 // loop_footer
      %s21 = sadd.s32 1, %s17
    $region7: #{tpu_custom_call.1} parent=1 // loop_footer_branch
      %16 = sbr.rel target = $region3
    $region8: #{tpu_custom_call.1} parent=1 // loop_exit
      _
    %290 = vsyncpa [#allocation3], 1
    %s291 = scalar_lea.sflag [#allocation3], 1
    %292 = vsyncpa %s291, 1
    %293 = vsyncpa [#allocation6], 1
    %s294 = scalar_lea.sflag [#allocation6], 1
    %295 = vsyncpa %s294, 1
    %296 = vsyncpa [#allocation4], 1
    %s297 = scalar_lea.sflag [#allocation4], 1
    %298 = vsyncpa %s297, 1

</llo_original>
